<compile_context>
chip_gen: v7x
topology: tpu7x:2x2x1
jax: 0.10.0
libtpu: 0.0.40
codegen_flags: <defaults>
</compile_context>

<pallas_src>
import numpy as np
import jax
import jax.numpy as jnp
from jax.experimental import pallas as pl
from jax.experimental.pallas import tpu as pltpu


def _round_up(x, m):
    return ((x + m - 1) // m) * m


def _make_stft_kernel(fp):
    def _stft_kernel(basis_ref, frames_ref, real_ref, imag_ref):
        # basis_ref : (2*Fp, K) bf16   -- cos rows stacked over (-sin) rows
        # frames_ref: (K, TN)   bf16   -- one batch element's frame tile, K-major
        acc = jnp.dot(basis_ref[...], frames_ref[...],
                      preferred_element_type=jnp.float32)      # (2*Fp, TN) f32
        real_ref[...] = acc[:fp, :]
        imag_ref[...] = acc[fp:, :]
    return _stft_kernel


def stft_pallas(frames_t, basis_t, fp, tn=256):
    """frames_t: (B, K, Nf) bf16, basis_t: (2*Fp, K) bf16.

    Returns real, imag, each (B, Fp, Nf_pad) f32 (caller slices valid region).
    """
    B, K, Nf = frames_t.shape
    F2, Kb = basis_t.shape
    assert Kb == K and F2 == 2 * fp and fp % 128 == 0

    # Frame tile (lane axis of the output).  Clamp for tiny inputs so the test
    # shapes stay small; realistic audio lengths use tn=256.
    tn = min(tn, _round_up(Nf, 128))
    nf_pad = _round_up(Nf, tn)
    if nf_pad != Nf:
        frames_t = jnp.pad(frames_t, ((0, 0), (0, 0), (0, nf_pad - Nf)))

    grid = (B, nf_pad // tn)
    out_shape = [jax.ShapeDtypeStruct((B, fp, nf_pad), jnp.float32)] * 2

    flops = 2 * B * nf_pad * K * (2 * fp)
    bytes_accessed = (2 * (B * K * nf_pad + 2 * fp * K)        # bf16 inputs
                      + 4 * 2 * B * fp * nf_pad)               # f32 outputs

    real, imag = pl.pallas_call(
        _make_stft_kernel(fp),
        out_shape=out_shape,
        grid_spec=pltpu.PrefetchScalarGridSpec(
            num_scalar_prefetch=0,
            grid=grid,
            in_specs=[
                # Constant index map -> Pallas DMAs the basis once.
                # TODO(synk): pipeline_mode=pl.Buffered(1) would drop the unused
                # second basis buffer (~1.6 MiB bf16); left at the default
                # double-buffering for lowering safety.
                pl.BlockSpec((2 * fp, K), lambda b, i: (0, 0)),
                pl.BlockSpec((None, K, tn), lambda b, i: (b, 0, i)),
            ],
            out_specs=[
                pl.BlockSpec((None, fp, tn), lambda b, i: (b, 0, i)),
                pl.BlockSpec((None, fp, tn), lambda b, i: (b, 0, i)),
            ],
        ),
        compiler_params=pltpu.CompilerParams(
            dimension_semantics=("parallel", "parallel"),
            # Per-step footprint (spec sizes, tn=256): basis 1.6 MiB + frames
            # 0.4 MiB + f32 outputs 1 MiB, double-buffered -> ~8 MiB.
            vmem_limit_bytes=32 * 1024 * 1024,
        ),
        cost_estimate=pl.CostEstimate(
            flops=flops, transcendentals=0, bytes_accessed=bytes_accessed),
    )(basis_t, frames_t)
    return real, imag


class STFT:
    """JAX/Pallas equivalent of the PyTorch STFT module (hann window)."""

    def __init__(self, filter_length=800, hop_length=200, win_length=800, window='hann'):
        assert window == 'hann'
        # TODO(synk): window zero-padding for win_length < filter_length not implemented.
        assert win_length == filter_length
        self.filter_length = filter_length
        self.hop_length = hop_length
        self.win_length = win_length
        self.num_freq = filter_length // 2 + 1

        n = np.arange(win_length)
        # periodic Hann == scipy.signal.get_window('hann', win_length, fftbins=True)
        window_np = 0.5 - 0.5 * np.cos(2.0 * np.pi * n / win_length)          # f64

        F = self.num_freq
        Fp = _round_up(F, 128)                 # lane/sublane aligned freq count
        self.num_freq_padded = Fp

        k = np.arange(F)
        t = np.arange(filter_length)
        ang = 2.0 * np.pi * np.outer(k, t) / filter_length                    # (F, K)
        w = window_np[None, :]
        basis = np.zeros((2 * Fp, filter_length), dtype=np.float32)
        basis[:F, :] = np.cos(ang) * w
        basis[Fp:Fp + F, :] = -np.sin(ang) * w          # torch.stft sign convention
        # bf16 operands feed the MXU at its native rate; accumulation stays f32.
        self.basis_t = jnp.asarray(basis, dtype=jnp.bfloat16)                 # (2*Fp, K)

    def frames_t(self, input_data):
        """(B, T) f32 -> ((B, K, n_frames) bf16 framed signal, n_frames)."""
        B, T = input_data.shape
        n_fft = self.filter_length
        hop = self.hop_length
        pad = n_fft // 2
        assert T > pad, "reflect padding requires T > n_fft // 2"
        # torch.stft defaults: center=True, pad_mode='reflect', onesided=True,
        # normalized=False.
        x = jnp.pad(input_data, ((0, 0), (pad, pad)), mode='reflect')
        x = x.astype(jnp.bfloat16)               # halves gather traffic
        Tp = x.shape[1]
        n_frames = 1 + (Tp - n_fft) // hop
        # K-major gather: the kernel output is then already (B, F, n_frames),
        # so no post-kernel transposes are needed.
        # TODO(synk): the frame gather still materializes the ~n_fft/hop-x
        # expanded windows in HBM; fusing it into the kernel (manual DMA of the
        # contiguous per-tile sample range) is left for a future revision.
        idx = np.arange(n_fft)[:, None] + (np.arange(n_frames) * hop)[None, :]
        return x[:, idx], n_frames               # (B, K, n_frames) bf16

    def __call__(self, input_data):
        # input_data: (B, T) f32 -> (mag, phase), each (B, F, n_frames) f32
        frames, n_frames = self.frames_t(input_data)
        real, imag = stft_pallas(frames, self.basis_t, self.num_freq_padded)
        F = self.num_freq
        real = real[:, :F, :n_frames]
        imag = imag[:, :F, :n_frames]
        # Magnitude and phase in one fused elementwise XLA pass over the kernel
        # outputs (already in the final layout).
        mag = jnp.sqrt(real * real + imag * imag)
        phase = jnp.arctan2(imag, real)
        return mag, phase


if __name__ == "__main__":
    key = jax.random.PRNGKey(0)
    B, T = 2, 64
    x = jax.random.normal(key, (B, T), dtype=jnp.float32)

    stft = STFT(filter_length=16, hop_length=4, win_length=16, window='hann')
    mag, phase = stft(x)
    mag = jax.block_until_ready(mag)
    phase = jax.block_until_ready(phase)

    F = stft.num_freq
    Fp = stft.num_freq_padded
    frames, n_frames = stft.frames_t(x)
    assert mag.shape == (B, F, n_frames)
    assert phase.shape == mag.shape

    # Reference: same bf16 operands, exact f64 contraction.
    basis = np.asarray(stft.basis_t, dtype=np.float64)            # (2*Fp, K)
    cos_b = basis[:F, :]
    sin_b = basis[Fp:Fp + F, :]
    fr = np.asarray(frames, dtype=np.float64)                     # (B, K, n_frames)
    ref_re = np.einsum('fk,bkt->bft', cos_b, fr)
    ref_im = np.einsum('fk,bkt->bft', sin_b, fr)
    ref_mag = np.sqrt(ref_re ** 2 + ref_im ** 2)
    ref_phase = np.arctan2(ref_im, ref_re)

    mag_np = np.asarray(mag)
    phase_np = np.asarray(phase)

    assert np.allclose(mag_np, ref_mag, atol=5e-3, rtol=5e-3)

    # Phase: compare modulo 2*pi (handles the +/-pi branch cut) on bins where
    # the phase is well conditioned (|X| not ~ 0).
    well = ref_mag > 1e-2 * ref_mag.max()
    dphi = np.abs(phase_np - ref_phase)
    dphi = np.minimum(dphi, 2.0 * np.pi - dphi)
    assert np.max(np.where(well, dphi, 0.0)) < 2e-2

    print("KERNEL_OK")
</pallas_src>

<mosaic_0001>
module attributes {stable_mosaic.version = 11 : i64} {
  func.func @_stft_kernel(%arg0: i32, %arg1: i32, %arg2: memref<256x16xbf16, #tpu.memory_space<vmem>>, %arg3: memref<1x16x128xbf16, #tpu.memory_space<vmem>>, %arg4: memref<1x128x128xf32, #tpu.memory_space<vmem>>, %arg5: memref<1x128x128xf32, #tpu.memory_space<vmem>>) attributes {dimension_semantics = [#tpu.dimension_semantics<parallel>, #tpu.dimension_semantics<parallel>], iteration_bounds = array<i64: 2, 1>, scalar_prefetch = 0 : i64, scratch_operands = 0 : i64, tpu.core_type = #tpu.core_type<tc>, window_params = [{pipeline_mode = #tpu.pipeline_mode<synchronous>, transform_indices = @transform_0, window_bounds = array<i64: 256, 16>}, {transform_indices = @transform_1, window_bounds = array<i64: 1, 16, 128>}, {transform_indices = @transform_2, window_bounds = array<i64: 1, 128, 128>}, {transform_indices = @transform_3, window_bounds = array<i64: 1, 128, 128>}]} {
    %c0 = arith.constant 0 : index
    %c0_0 = arith.constant 0 : index
    %0 = vector.load %arg2[%c0, %c0_0] : memref<256x16xbf16, #tpu.memory_space<vmem>>, vector<256x16xbf16>
    %c0_1 = arith.constant 0 : index
    %c0_2 = arith.constant 0 : index
    %c0_3 = arith.constant 0 : index
    %1 = vector.load %arg3[%c0_1, %c0_2, %c0_3] : memref<1x16x128xbf16, #tpu.memory_space<vmem>>, vector<1x16x128xbf16>
    %2 = vector.shape_cast %1 : vector<1x16x128xbf16> to vector<16x128xbf16>
    %cst = arith.constant dense<0.000000e+00> : vector<256x128xf32>
    %3 = tpu.matmul %0, %2, %cst {dimension_numbers = #tpu.dot_dimension_numbers<[1], [0], [0], [1], [0, 0, 1, 1], [], []>} : vector<256x16xbf16>, vector<16x128xbf16>, vector<256x128xf32> -> vector<256x128xf32>
    %4 = vector.extract_strided_slice %3 {offsets = [0, 0], sizes = [128, 128], strides = [1, 1]} : vector<256x128xf32> to vector<128x128xf32>
    %c0_4 = arith.constant 0 : index
    %c0_5 = arith.constant 0 : index
    %c0_6 = arith.constant 0 : index
    %5 = vector.load %arg4[%c0_4, %c0_5, %c0_6] : memref<1x128x128xf32, #tpu.memory_space<vmem>>, vector<1x128x128xf32>
    %6 = vector.shape_cast %5 : vector<1x128x128xf32> to vector<128x128xf32>
    %7 = vector.shape_cast %4 : vector<128x128xf32> to vector<1x128x128xf32>
    tpu.vector_store %arg4[%c0_4, %c0_5, %c0_6], %7 {strides = array<i32>} : memref<1x128x128xf32, #tpu.memory_space<vmem>>, vector<1x128x128xf32>,
    %8 = vector.extract_strided_slice %3 {offsets = [128, 0], sizes = [128, 128], strides = [1, 1]} : vector<256x128xf32> to vector<128x128xf32>
    %c0_7 = arith.constant 0 : index
    %c0_8 = arith.constant 0 : index
    %c0_9 = arith.constant 0 : index
    %9 = vector.load %arg5[%c0_7, %c0_8, %c0_9] : memref<1x128x128xf32, #tpu.memory_space<vmem>>, vector<1x128x128xf32>
    %10 = vector.shape_cast %9 : vector<1x128x128xf32> to vector<128x128xf32>
    %11 = vector.shape_cast %8 : vector<128x128xf32> to vector<1x128x128xf32>
    tpu.vector_store %arg5[%c0_7, %c0_8, %c0_9], %11 {strides = array<i32>} : memref<1x128x128xf32, #tpu.memory_space<vmem>>, vector<1x128x128xf32>,
    return
  }
  func.func @transform_0(%arg0: i32, %arg1: i32) -> (i32, i32) {
    %c0_i32 = arith.constant 0 : i32
    %c0_i32_0 = arith.constant 0 : i32
    %c0_i32_1 = arith.constant 0 : i32
    return %c0_i32, %c0_i32_0 : i32, i32
  }
  func.func @transform_1(%arg0: i32, %arg1: i32) -> (i32, i32, i32) {
    %c0_i32 = arith.constant 0 : i32
    %c0_i32_0 = arith.constant 0 : i32
    return %arg0, %c0_i32, %arg1 : i32, i32, i32
  }
  func.func @transform_2(%arg0: i32, %arg1: i32) -> (i32, i32, i32) {
    %c0_i32 = arith.constant 0 : i32
    %c0_i32_0 = arith.constant 0 : i32
    return %arg0, %c0_i32, %arg1 : i32, i32, i32
  }
  func.func @transform_3(%arg0: i32, %arg1: i32) -> (i32, i32, i32) {
    %c0_i32 = arith.constant 0 : i32
    %c0_i32_0 = arith.constant 0 : i32
    return %arg0, %c0_i32, %arg1 : i32, i32, i32
  }
}

</mosaic_0001>

<llo_original>
// kernel: tpu_custom_call.1
$region0: #{tpu_custom_call.1}
  #allocation0 [shape = 'u32[]', space=smem, size = 0x4, offset = 0x4, fixed_abs, tag = 'smem constant byte address 0x4 - core index']
  #allocation1 [shape = 'u32[144,128]{1,0:T(1,128)}', space=vmem, size = 0x12000, scoped, tag = 'internal scratch']
  %s0 = inlined_call_operand.vmem [shape: bf16[256,16], index: 0, kind: input, shape index: {}]
  %s1 = inlined_call_operand.vmem [shape: bf16[2,16,128], index: 1, kind: input, shape index: {}]
  %s2 = inlined_call_operand.hbm [shape: f32[2,128,128], index: 2, kind: output, shape index: {0}]
  %s3 = inlined_call_operand.hbm [shape: f32[2,128,128], index: 3, kind: output, shape index: {1}]
  %4 = xla_tuple %s2, %s3
  %s5 = sld [smem:[#allocation0]]
  $region49: #{tpu_custom_call.1} parent=0
    _
  %s7 = ssub.s32 1, %s5
  %s8 = scalar_select 0, %s7, %s5
  $region1: #{tpu_custom_call.1} parent=0
    #allocation2 [shape = 'u8[131072]{0}', space=vmem, size = 0x20000, scoped, tag = 'output window, operand 0']
    #allocation3 [shape = 's32[2]{0}', space=sflag, size = 0x8, scoped, tag = 'scoped memory for tpu_custom_call.1']
    #allocation4 [shape = 'u8[131072]{0}', space=vmem, size = 0x20000, scoped, tag = 'output window, operand 1']
    #allocation5 [shape = 's32[2]{0}', space=sflag, size = 0x8, scoped, tag = 'scoped memory for tpu_custom_call.1']
    %9 = vsyncpa [#allocation3], 0
    %s10 = scalar_lea.sflag [#allocation3], 1
    %11 = vsyncpa %s10, 0
    %12 = vsyncpa [#allocation5], 0
    %s13 = scalar_lea.sflag [#allocation5], 1
    %14 = vsyncpa %s13, 0
    loop: start=0, step=1, limit=4
    $region2: #{tpu_custom_call.1} parent=1 // loop_pre_header
      _
    $region3: #{tpu_custom_call.1} parent=1 // loop_header
      %s16 = sphi 0, %s20
      %p17 = scmp.ge.s32.totalorder %s16, 4
      %s23 = sphi 0, %s35
      %s24 = sphi 0, %s31
      %s25 = sphi 0, %s23
      %s26 = sphi 0, %s24
      %s27 = sphi 0, %s25
      %s28 = sphi 0, %s26
      %s36 = sphi 0, %s36
      %s38 = sphi 0, %s36
      %s39 = sphi 0, %s38
      %s53 = sphi 0, %s39
      %s61 = sphi 0, %s63
      %s64 = sphi 0, %s61
      %s65 = sphi 0, %s64
      %s81 = sphi 0, %s65
      %s89 = sphi 0, %s91
      %s92 = sphi 0, %s89
      %s93 = sphi 0, %s92
      %s109 = sphi 0, %s93
      %s117 = sphi 0, %s119
      %s120 = sphi 0, %s117
      %s121 = sphi 0, %s120
      %s137 = sphi 0, %s121
    $region4: #{tpu_custom_call.1} parent=1 // loop_header_branch
      %19 = sbr.rel (%p17) target = $region8
    $region5: #{tpu_custom_call.1} parent=1 // loop_body
      %s21 = ssub.s32 %s16, 1
      %s22 = ssub.s32 %s16, 2
      %s29 = sadd.s32 1, %s24
      %p30 = scmp.ge.s32.totalorder %s29, 1
      %s31 = scalar_select %p30, 0, %s29
      %s32 = sadd.s32 1, %s23
      %s33 = scalar_select %p30, %s32, %s23
      %p34 = scmp.ge.s32.totalorder %s33, 2
      %s35 = scalar_select %p34, 0, %s33
      %s37 = sadd.s32 %s36, 1
      %p40 = scmp.eq.s32.totalorder %s16, 1
      %p41 = scmp.ne.s32.totalorder %s36, %s38
      %p42 = scmp.eq.s32.totalorder %s16, 0
      %p43 = por %p41, %p42
      %p44 = scmp.ne.s32.totalorder %s36, %s38
      %p45 = scmp.eq.s32.totalorder %s21, 1
      %p46 = por %p44, %p45
      %p47 = scmp.ne.s32.totalorder %s38, %s39
      %p48 = scmp.eq.s32.totalorder %s21, 0
      %p49 = por %p47, %p48
      %p50 = scmp.ne.s32.totalorder %s38, %s39
      %p51 = scmp.eq.s32.totalorder %s22, 1
      %p52 = por %p50, %p51
      %p54 = scmp.ne.s32.totalorder %s39, %s53
      %p55 = scmp.eq.s32.totalorder %s22, 0
      %p56 = por %p54, %p55
      %s57 = ssub.s32 %s23, %s35
      %s58 = ssub.s32 %s24, %s31
      %s59 = sor.u32 %s57, %s58
      %p60 = scmp.eq.s32.totalorder %s59, 0
      %s62 = sadd.s32 %s61, 1
      %s63 = scalar_select %p60, %s61, %s62
      %p66 = pneg %p60
      %p67 = scmp.eq.s32.totalorder %s16, 1
      %p68 = por %p66, %p67
      %p69 = scmp.ne.s32.totalorder %s61, %s64
      %p70 = scmp.eq.s32.totalorder %s16, 0
      %p71 = por %p69, %p70
      %p72 = scmp.ne.s32.totalorder %s61, %s64
      %p73 = scmp.eq.s32.totalorder %s21, 1
      %p74 = por %p72, %p73
      %p75 = scmp.ne.s32.totalorder %s64, %s65
      %p76 = scmp.eq.s32.totalorder %s21, 0
      %p77 = por %p75, %p76
      %p78 = scmp.ne.s32.totalorder %s64, %s65
      %p79 = scmp.eq.s32.totalorder %s22, 1
      %p80 = por %p78, %p79
      %p82 = scmp.ne.s32.totalorder %s65, %s81
      %p83 = scmp.eq.s32.totalorder %s22, 0
      %p84 = por %p82, %p83
      %s85 = ssub.s32 %s23, %s35
      %s86 = ssub.s32 %s24, %s31
      %s87 = sor.u32 %s85, %s86
      %p88 = scmp.eq.s32.totalorder %s87, 0
      %s90 = sadd.s32 %s89, 1
      %s91 = scalar_select %p88, %s89, %s90
      %p94 = pneg %p88
      %p95 = scmp.eq.s32.totalorder %s16, 1
      %p96 = por %p94, %p95
      %p97 = scmp.ne.s32.totalorder %s89, %s92
      %p98 = scmp.eq.s32.totalorder %s16, 0
      %p99 = por %p97, %p98
      %p100 = scmp.ne.s32.totalorder %s89, %s92
      %p101 = scmp.eq.s32.totalorder %s21, 1
      %p102 = por %p100, %p101
      %p103 = scmp.ne.s32.totalorder %s92, %s93
      %p104 = scmp.eq.s32.totalorder %s21, 0
      %p105 = por %p103, %p104
      %p106 = scmp.ne.s32.totalorder %s92, %s93
      %p107 = scmp.eq.s32.totalorder %s22, 1
      %p108 = por %p106, %p107
      %p110 = scmp.ne.s32.totalorder %s93, %s109
      %p111 = scmp.eq.s32.totalorder %s22, 0
      %p112 = por %p110, %p111
      %s113 = ssub.s32 %s23, %s35
      %s114 = ssub.s32 %s24, %s31
      %s115 = sor.u32 %s113, %s114
      %p116 = scmp.eq.s32.totalorder %s115, 0
      %s118 = sadd.s32 %s117, 1
      %s119 = scalar_select %p116, %s117, %s118
      %p122 = pneg %p116
      %p123 = scmp.eq.s32.totalorder %s16, 1
      %p124 = por %p122, %p123
      %p125 = scmp.ne.s32.totalorder %s117, %s120
      %p126 = scmp.eq.s32.totalorder %s16, 0
      %p127 = por %p125, %p126
      %p128 = scmp.ne.s32.totalorder %s117, %s120
      %p129 = scmp.eq.s32.totalorder %s21, 1
      %p130 = por %p128, %p129
      %p131 = scmp.ne.s32.totalorder %s120, %s121
      %p132 = scmp.eq.s32.totalorder %s21, 0
      %p133 = por %p131, %p132
      %p134 = scmp.ne.s32.totalorder %s120, %s121
      %p135 = scmp.eq.s32.totalorder %s22, 1
      %p136 = por %p134, %p135
      %p138 = scmp.ne.s32.totalorder %s121, %s137
      %p139 = scmp.eq.s32.totalorder %s22, 0
      %p140 = por %p138, %p139
      %p141 = scmp.le.s32.totalorder 1, %s16
      %p142 = scmp.lt.s32.totalorder %s16, 3
      %p143 = pnand %p141, %p142
      %p144 = pneg %p143
      // Predicated region
      $region9: #{tpu_custom_call.1} parent=5 // pred_check
        _
      $region10: #{tpu_custom_call.1} parent=5 // pred_check_branch
        %146 = sbr.rel (%p143) target = $region12
      $region11: #{tpu_custom_call.1} parent=5 // pred_region
        %s147 = ssub.s32 %s16, 1
        // Predicated region
        $region13: #{tpu_custom_call.1} parent=11 // pred_check
          %p148 = pneg %p49
        $region14: #{tpu_custom_call.1} parent=11 // pred_check_branch
          %150 = sbr.rel (%p148) target = $region16
        $region15: #{tpu_custom_call.1} parent=11 // pred_region
          _
        $region16: #{tpu_custom_call.1} parent=11 // pred_fallthru
          _
      $region12: #{tpu_custom_call.1} parent=5 // pred_fallthru
        _
      %p151 = scmp.lt.s32.totalorder %s16, 2
      // Predicated region
      $region17: #{tpu_custom_call.1} parent=5 // pred_check
        %p152 = pneg %p151
      $region18: #{tpu_custom_call.1} parent=5 // pred_check_branch
        %154 = sbr.rel (%p152) target = $region20
      $region19: #{tpu_custom_call.1} parent=5 // pred_region
        // Predicated region
        $region21: #{tpu_custom_call.1} parent=19 // pred_check
          %p155 = pneg %p71
        $region22: #{tpu_custom_call.1} parent=19 // pred_check_branch
          %157 = sbr.rel (%p155) target = $region24
        $region23: #{tpu_custom_call.1} parent=19 // pred_region
          %p158 = scmp.lt.s32.totalorder %s23, 1
          %s159 = scalar_select %p158, %s23, 1
          %p160 = scmp.lt.s32.totalorder %s24, 0
          %s161 = scalar_select %p160, %s24, 0
          %s162 = smul.addr %s159, 2
          %s163 = sadd.s32 %s161, %s162
          %s164 = smul.addr %s163, 4
          %s165 = scalar_lea.vmem %s1, %s164
        $region24: #{tpu_custom_call.1} parent=19 // pred_fallthru
          _
      $region20: #{tpu_custom_call.1} parent=5 // pred_fallthru
        _
      %p166 = scmp.le.s32.totalorder 1, %s16
      %p167 = scmp.lt.s32.totalorder %s16, 3
      %p168 = pnand %p166, %p167
      %p169 = pneg %p168
      // Predicated region
      $region25: #{tpu_custom_call.1} parent=5 // pred_check
        _
      $region26: #{tpu_custom_call.1} parent=5 // pred_check_branch
        %171 = sbr.rel (%p168) target = $region28
      $region27: #{tpu_custom_call.1} parent=5 // pred_region
        %s172 = ssub.s32 %s16, 1
        %p173 = pneg %p49
        %p174 = pneg %p46
        %p175 = scmp.lt.s32.totalorder %s25, 1
        %s176 = scalar_select %p175, %s25, 1
        %p177 = scmp.lt.s32.totalorder %s26, 0
        %s178 = scalar_select %p177, %s26, 0
        %s179 = smul.addr %s176, 2
        %s180 = sadd.s32 %s178, %s179
        %s181 = smul.addr %s180, 4
        %s182 = scalar_lea.vmem %s1, %s181
        %p183 = pneg %p77
        %p184 = pneg %p74
        %p185 = pneg %p105
        %p186 = pneg %p102
        %s187 = sand.u32 %s92, 1
        %s188 = scalar_lea.sflag [#allocation3], %s187
        %s189 = sand.u32 %s92, 1
        %s190 = smul.addr %s189, 128
        %s191 = scalar_lea.vmem [#allocation2], %s190
        %p192 = pneg %p133
        %p193 = pneg %p130
        %s194 = sand.u32 %s120, 1
        %s195 = scalar_lea.sflag [#allocation5], %s194
        %s196 = sand.u32 %s120, 1
        %s197 = smul.addr %s196, 128
        %s198 = scalar_lea.vmem [#allocation4], %s197
        %p199 = scmp.lt.s32.totalorder %s25, 1
        %s200 = scalar_select %p199, %s25, 1
        %p201 = scmp.lt.s32.totalorder %s26, 0
        %s202 = scalar_select %p201, %s26, 0
        %s203 = smul.addr %s200, 2
        %s204 = sadd.s32 %s202, %s203
        %s205 = smul.addr %s204, 4
        %s206 = scalar_lea.vmem %s1, %s205
        %v208 = vld [vmem:[%s0] sm:$0xf]
        %v209 = vld [vmem:[%s0 + $0x4] sm:$0xf]
        %v210 = vld [vmem:[%s0 + $0x8] sm:$0xf]
        %v211 = vld [vmem:[%s0 + $0xc] sm:$0xf]
        %v212 = vld [vmem:[%s0 + $0x10] sm:$0xf]
        %v213 = vld [vmem:[%s0 + $0x14] sm:$0xf]
        %v214 = vld [vmem:[%s0 + $0x18] sm:$0xf]
        %v215 = vld [vmem:[%s0 + $0x1c] sm:$0xf]
        %v216 = vld [vmem:[%s0 + $0x20] sm:$0xf]
        %v217 = vld [vmem:[%s0 + $0x24] sm:$0xf]
        %v218 = vld [vmem:[%s0 + $0x28] sm:$0xf]
        %v219 = vld [vmem:[%s0 + $0x2c] sm:$0xf]
        %v220 = vld [vmem:[%s0 + $0x30] sm:$0xf]
        %v221 = vld [vmem:[%s0 + $0x34] sm:$0xf]
        %v222 = vld [vmem:[%s0 + $0x38] sm:$0xf]
        %v223 = vld [vmem:[%s0 + $0x3c] sm:$0xf]
        %v224 = vld [vmem:[%s0 + $0x40] sm:$0xf]
        %v225 = vld [vmem:[%s0 + $0x44] sm:$0xf]
        %v226 = vld [vmem:[%s0 + $0x48] sm:$0xf]
        %v227 = vld [vmem:[%s0 + $0x4c] sm:$0xf]
        %v228 = vld [vmem:[%s0 + $0x50] sm:$0xf]
        %v229 = vld [vmem:[%s0 + $0x54] sm:$0xf]
        %v230 = vld [vmem:[%s0 + $0x58] sm:$0xf]
        %v231 = vld [vmem:[%s0 + $0x5c] sm:$0xf]
        %v232 = vld [vmem:[%s0 + $0x60] sm:$0xf]
        %v233 = vld [vmem:[%s0 + $0x64] sm:$0xf]
        %v234 = vld [vmem:[%s0 + $0x68] sm:$0xf]
        %v235 = vld [vmem:[%s0 + $0x6c] sm:$0xf]
        %v236 = vld [vmem:[%s0 + $0x70] sm:$0xf]
        %v237 = vld [vmem:[%s0 + $0x74] sm:$0xf]
        %v238 = vld [vmem:[%s0 + $0x78] sm:$0xf]
        %v239 = vld [vmem:[%s0 + $0x7c] sm:$0xf]
        %v240 = vld [vmem:[%s206] sm:$0xf]
        %v241 = vld [vmem:[%s206 + $0x4] sm:$0xf]
        %v274 = vunpack.c.l.b16 %v208
        %v275 = vunpack.c.l.b16 %v209
        %v276 = vunpack.c.l.b16 %v210
        %v277 = vunpack.c.l.b16 %v211
        %v278 = vunpack.c.l.b16 %v212
        %v279 = vunpack.c.l.b16 %v213
        %v280 = vunpack.c.l.b16 %v214
        %v281 = vunpack.c.l.b16 %v215
        %v282 = vunpack.c.l.b16 %v216
        %v283 = vunpack.c.l.b16 %v217
        %v284 = vunpack.c.l.b16 %v218
        %v285 = vunpack.c.l.b16 %v219
        %v286 = vunpack.c.l.b16 %v220
        %v287 = vunpack.c.l.b16 %v221
        %v288 = vunpack.c.l.b16 %v222
        %v289 = vunpack.c.l.b16 %v223
        %v290 = vunpack.c.l.b16 %v224
        %v291 = vunpack.c.l.b16 %v225
        %v292 = vunpack.c.l.b16 %v226
        %v293 = vunpack.c.l.b16 %v227
        %v294 = vunpack.c.l.b16 %v228
        %v295 = vunpack.c.l.b16 %v229
        %v296 = vunpack.c.l.b16 %v230
        %v297 = vunpack.c.l.b16 %v231
        %v298 = vunpack.c.l.b16 %v232
        %v299 = vunpack.c.l.b16 %v233
        %v300 = vunpack.c.l.b16 %v234
        %v301 = vunpack.c.l.b16 %v235
        %v302 = vunpack.c.l.b16 %v236
        %v303 = vunpack.c.l.b16 %v237
        %v304 = vunpack.c.l.b16 %v238
        %v305 = vunpack.c.l.b16 %v239
        %v306 = vpack.c.b16 %v275, %v274
        %v307 = vpack.c.b16 %v277, %v276
        %v308 = vpack.c.b16 %v279, %v278
        %v309 = vpack.c.b16 %v281, %v280
        %v310 = vpack.c.b16 %v283, %v282
        %v311 = vpack.c.b16 %v285, %v284
        %v312 = vpack.c.b16 %v287, %v286
        %v313 = vpack.c.b16 %v289, %v288
        %v314 = vpack.c.b16 %v291, %v290
        %v315 = vpack.c.b16 %v293, %v292
        %v316 = vpack.c.b16 %v295, %v294
        %v317 = vpack.c.b16 %v297, %v296
        %v318 = vpack.c.b16 %v299, %v298
        %v319 = vpack.c.b16 %v301, %v300
        %v320 = vpack.c.b16 %v303, %v302
        %v321 = vpack.c.b16 %v305, %v304
        %v324 = vunpack.c.l.b16 %v240
        %v325 = vunpack.c.l.b16 %v241
        %v326 = vpack.c.b16 %v325, %v324
        %vm328 = vcmask 130048
        %v330 = vsel %vm328, %v306, 0
        %v333 = vsel %vm328, %v307, 0
        %v336 = vsel %vm328, %v308, 0
        %v339 = vsel %vm328, %v309, 0
        %v342 = vsel %vm328, %v310, 0
        %v345 = vsel %vm328, %v311, 0
        %v348 = vsel %vm328, %v312, 0
        %v351 = vsel %vm328, %v313, 0
        %v354 = vsel %vm328, %v314, 0
        %v357 = vsel %vm328, %v315, 0
        %v360 = vsel %vm328, %v316, 0
        %v363 = vsel %vm328, %v317, 0
        %v366 = vsel %vm328, %v318, 0
        %v369 = vsel %vm328, %v319, 0
        %v372 = vsel %vm328, %v320, 0
        %v375 = vsel %vm328, %v321, 0
        %377 = vmatprep.subr.bf16.mxu0 0
        %378 = vmatpush1.bf16.msra.mxu0 %v326
        %379 = vmatprep.subr.bf16.mxu0 0
        %380 = vmatpush1.bf16.msra.mxu0 0
        %381 = vmatprep.subr.bf16.mxu0 0
        %382 = vmatpush1.bf16.msra.mxu0 0
        %383 = vmatprep.subr.bf16.mxu0 0
        %384 = vmatpush1.bf16.msra.mxu0 0
        %385 = vmatprep.subr.bf16.mxu0 0
        %386 = vmatpush1.bf16.msra.mxu0 0
        %387 = vmatprep.subr.bf16.mxu0 0
        %388 = vmatpush1.bf16.msra.mxu0 0
        %389 = vmatprep.subr.bf16.mxu0 0
        %390 = vmatpush1.bf16.msra.mxu0 0
        %391 = vmatprep.subr.bf16.mxu0 0
        %392 = vmatpush1.bf16.msra.mxu0 0
        %393 = vmatprep.subr.bf16.mxu0 0
        %394 = vmatpush1.bf16.msra.mxu0 0
        %395 = vmatprep.subr.bf16.mxu0 0
        %396 = vmatpush1.bf16.msra.mxu0 0
        %397 = vmatprep.subr.bf16.mxu0 0
        %398 = vmatpush1.bf16.msra.mxu0 0
        %399 = vmatprep.subr.bf16.mxu0 0
        %400 = vmatpush1.bf16.msra.mxu0 0
        %401 = vmatprep.subr.bf16.mxu0 0
        %402 = vmatpush1.bf16.msra.mxu0 0
        %403 = vmatprep.subr.bf16.mxu0 0
        %404 = vmatpush1.bf16.msra.mxu0 0
        %405 = vmatprep.subr.bf16.mxu0 0
        %406 = vmatpush1.bf16.msra.mxu0 0
        %407 = vmatprep.subr.bf16.mxu0 0
        %408 = vmatpush1.bf16.msra.mxu0 0
        %409 = vmatprep.mubr.bf16.mxu0 0
        %410 = vmatmul.mubr.bf16.gmra.mrb[0].mxu0 %v330
        %v411 = vpop.f32.mrb[0].mxu0
        %v412 = vadd.f32 0.0, %v411
        %v413 = vpop.f32.mrb[0].mxu0
        %v414 = vpop.f32.mrb[0].mxu0
        %v415 = vadd.f32 0.0, %v414
        %v416 = vpop.f32.mrb[0].mxu0
        %417 = vmatprep.mubr.bf16.mxu0 0
        %418 = vmatmul.mubr.bf16.gmra.mrb[0].mxu0 %v333
        %v419 = vpop.f32.mrb[0].mxu0
        %v420 = vadd.f32 0.0, %v419
        %v421 = vpop.f32.mrb[0].mxu0
        %v422 = vpop.f32.mrb[0].mxu0
        %v423 = vadd.f32 0.0, %v422
        %v424 = vpop.f32.mrb[0].mxu0
        %425 = vmatprep.mubr.bf16.mxu0 0
        %426 = vmatmul.mubr.bf16.gmra.mrb[0].mxu0 %v336
        %v427 = vpop.f32.mrb[0].mxu0
        %v428 = vadd.f32 0.0, %v427
        %v429 = vpop.f32.mrb[0].mxu0
        %v430 = vpop.f32.mrb[0].mxu0
        %v431 = vadd.f32 0.0, %v430
        %v432 = vpop.f32.mrb[0].mxu0
        %433 = vmatprep.mubr.bf16.mxu0 0
        %434 = vmatmul.mubr.bf16.gmra.mrb[0].mxu0 %v339
        %v435 = vpop.f32.mrb[0].mxu0
        %v436 = vadd.f32 0.0, %v435
        %v437 = vpop.f32.mrb[0].mxu0
        %v438 = vpop.f32.mrb[0].mxu0
        %v439 = vadd.f32 0.0, %v438
        %v440 = vpop.f32.mrb[0].mxu0
        %441 = vmatprep.mubr.bf16.mxu0 0
        %442 = vmatmul.mubr.bf16.gmra.mrb[0].mxu0 %v342
        %v443 = vpop.f32.mrb[0].mxu0
        %v444 = vadd.f32 0.0, %v443
        %v445 = vpop.f32.mrb[0].mxu0
        %v446 = vpop.f32.mrb[0].mxu0
        %v447 = vadd.f32 0.0, %v446
        %v448 = vpop.f32.mrb[0].mxu0
        %449 = vmatprep.mubr.bf16.mxu0 0
        %450 = vmatmul.mubr.bf16.gmra.mrb[0].mxu0 %v345
        %v451 = vpop.f32.mrb[0].mxu0
        %v452 = vadd.f32 0.0, %v451
        %v453 = vpop.f32.mrb[0].mxu0
        %v454 = vpop.f32.mrb[0].mxu0
        %v455 = vadd.f32 0.0, %v454
        %v456 = vpop.f32.mrb[0].mxu0
        %457 = vmatprep.mubr.bf16.mxu0 0
        %458 = vmatmul.mubr.bf16.gmra.mrb[0].mxu0 %v348
        %v459 = vpop.f32.mrb[0].mxu0
        %v460 = vadd.f32 0.0, %v459
        %v461 = vpop.f32.mrb[0].mxu0
        %v462 = vpop.f32.mrb[0].mxu0
        %v463 = vadd.f32 0.0, %v462
        %v464 = vpop.f32.mrb[0].mxu0
        %465 = vmatprep.mubr.bf16.mxu0 0
        %466 = vmatmul.mubr.bf16.gmra.mrb[0].mxu0 %v351
        %v467 = vpop.f32.mrb[0].mxu0
        %v468 = vadd.f32 0.0, %v467
        %v469 = vpop.f32.mrb[0].mxu0
        %v470 = vpop.f32.mrb[0].mxu0
        %v471 = vadd.f32 0.0, %v470
        %v472 = vpop.f32.mrb[0].mxu0
        %473 = vmatprep.mubr.bf16.mxu0 0
        %474 = vmatmul.mubr.bf16.gmra.mrb[0].mxu0 %v354
        %v475 = vpop.f32.mrb[0].mxu0
        %v476 = vadd.f32 0.0, %v475
        %v477 = vpop.f32.mrb[0].mxu0
        %v478 = vpop.f32.mrb[0].mxu0
        %v479 = vadd.f32 0.0, %v478
        %v480 = vpop.f32.mrb[0].mxu0
        %481 = vmatprep.mubr.bf16.mxu0 0
        %482 = vmatmul.mubr.bf16.gmra.mrb[0].mxu0 %v357
        %v483 = vpop.f32.mrb[0].mxu0
        %v484 = vadd.f32 0.0, %v483
        %v485 = vpop.f32.mrb[0].mxu0
        %v486 = vpop.f32.mrb[0].mxu0
        %v487 = vadd.f32 0.0, %v486
        %v488 = vpop.f32.mrb[0].mxu0
        %489 = vmatprep.mubr.bf16.mxu0 0
        %490 = vmatmul.mubr.bf16.gmra.mrb[0].mxu0 %v360
        %v491 = vpop.f32.mrb[0].mxu0
        %v492 = vadd.f32 0.0, %v491
        %v493 = vpop.f32.mrb[0].mxu0
        %v494 = vpop.f32.mrb[0].mxu0
        %v495 = vadd.f32 0.0, %v494
        %v496 = vpop.f32.mrb[0].mxu0
        %497 = vmatprep.mubr.bf16.mxu0 0
        %498 = vmatmul.mubr.bf16.gmra.mrb[0].mxu0 %v363
        %v499 = vpop.f32.mrb[0].mxu0
        %v500 = vadd.f32 0.0, %v499
        %v501 = vpop.f32.mrb[0].mxu0
        %v502 = vpop.f32.mrb[0].mxu0
        %v503 = vadd.f32 0.0, %v502
        %v504 = vpop.f32.mrb[0].mxu0
        %505 = vmatprep.mubr.bf16.mxu0 0
        %506 = vmatmul.mubr.bf16.gmra.mrb[0].mxu0 %v366
        %v507 = vpop.f32.mrb[0].mxu0
        %v508 = vadd.f32 0.0, %v507
        %v509 = vpop.f32.mrb[0].mxu0
        %v510 = vpop.f32.mrb[0].mxu0
        %v511 = vadd.f32 0.0, %v510
        %v512 = vpop.f32.mrb[0].mxu0
        %513 = vmatprep.mubr.bf16.mxu0 0
        %514 = vmatmul.mubr.bf16.gmra.mrb[0].mxu0 %v369
        %v515 = vpop.f32.mrb[0].mxu0
        %v516 = vadd.f32 0.0, %v515
        %v517 = vpop.f32.mrb[0].mxu0
        %v518 = vpop.f32.mrb[0].mxu0
        %v519 = vadd.f32 0.0, %v518
        %v520 = vpop.f32.mrb[0].mxu0
        %521 = vmatprep.mubr.bf16.mxu0 0
        %522 = vmatmul.mubr.bf16.gmra.mrb[0].mxu0 %v372
        %v523 = vpop.f32.mrb[0].mxu0
        %v524 = vadd.f32 0.0, %v523
        %v525 = vpop.f32.mrb[0].mxu0
        %v526 = vpop.f32.mrb[0].mxu0
        %v527 = vadd.f32 0.0, %v526
        %v528 = vpop.f32.mrb[0].mxu0
        %529 = vmatprep.mubr.bf16.mxu0 0
        %530 = vmatmul.mubr.bf16.gmra.mrb[0].mxu0 %v375
        %v531 = vpop.f32.mrb[0].mxu0
        %v532 = vadd.f32 0.0, %v531
        %v533 = vpop.f32.mrb[0].mxu0
        %v534 = vpop.f32.mrb[0].mxu0
        %v535 = vadd.f32 0.0, %v534
        %v536 = vpop.f32.mrb[0].mxu0
        %537 = vdwg.mxu0
        %538 = vst [vmem:[%s191] sm:$0xff] %v412
        %539 = vst [vmem:[%s191 + $0x8] sm:$0xff] %v415
        %540 = vst [vmem:[%s191 + $0x10] sm:$0xff] %v420
        %541 = vst [vmem:[%s191 + $0x18] sm:$0xff] %v423
        %542 = vst [vmem:[%s191 + $0x20] sm:$0xff] %v428
        %543 = vst [vmem:[%s191 + $0x28] sm:$0xff] %v431
        %544 = vst [vmem:[%s191 + $0x30] sm:$0xff] %v436
        %545 = vst [vmem:[%s191 + $0x38] sm:$0xff] %v439
        %546 = vst [vmem:[%s191 + $0x40] sm:$0xff] %v444
        %547 = vst [vmem:[%s191 + $0x48] sm:$0xff] %v447
        %548 = vst [vmem:[%s191 + $0x50] sm:$0xff] %v452
        %549 = vst [vmem:[%s191 + $0x58] sm:$0xff] %v455
        %550 = vst [vmem:[%s191 + $0x60] sm:$0xff] %v460
        %551 = vst [vmem:[%s191 + $0x68] sm:$0xff] %v463
        %552 = vst [vmem:[%s191 + $0x70] sm:$0xff] %v468
        %553 = vst [vmem:[%s191 + $0x78] sm:$0xff] %v471
        %554 = vst [vmem:[%s198] sm:$0xff] %v476
        %555 = vst [vmem:[%s198 + $0x8] sm:$0xff] %v479
        %556 = vst [vmem:[%s198 + $0x10] sm:$0xff] %v484
        %557 = vst [vmem:[%s198 + $0x18] sm:$0xff] %v487
        %558 = vst [vmem:[%s198 + $0x20] sm:$0xff] %v492
        %559 = vst [vmem:[%s198 + $0x28] sm:$0xff] %v495
        %560 = vst [vmem:[%s198 + $0x30] sm:$0xff] %v500
        %561 = vst [vmem:[%s198 + $0x38] sm:$0xff] %v503
        %562 = vst [vmem:[%s198 + $0x40] sm:$0xff] %v508
        %563 = vst [vmem:[%s198 + $0x48] sm:$0xff] %v511
        %564 = vst [vmem:[%s198 + $0x50] sm:$0xff] %v516
        %565 = vst [vmem:[%s198 + $0x58] sm:$0xff] %v519
        %566 = vst [vmem:[%s198 + $0x60] sm:$0xff] %v524
        %567 = vst [vmem:[%s198 + $0x68] sm:$0xff] %v527
        %568 = vst [vmem:[%s198 + $0x70] sm:$0xff] %v532
        %569 = vst [vmem:[%s198 + $0x78] sm:$0xff] %v535
        %s570 = sand.u32 %s92, 1
        %s571 = scalar_lea.sflag [#allocation3], %s570
        %s572 = sand.u32 %s92, 1
        %s573 = smul.addr %s572, 128
        %s574 = scalar_lea.vmem [#allocation2], %s573
        %s575 = sand.u32 %s120, 1
        %s576 = scalar_lea.sflag [#allocation5], %s575
        %s577 = sand.u32 %s120, 1
        %s578 = smul.addr %s577, 128
        %s579 = scalar_lea.vmem [#allocation4], %s578
        // Predicated region
        $region29: #{tpu_custom_call.1} parent=27 // pred_check
          %p580 = pneg %p102
        $region30: #{tpu_custom_call.1} parent=27 // pred_check_branch
          %582 = sbr.rel (%p580) target = $region32
        $region31: #{tpu_custom_call.1} parent=27 // pred_region
          %s584 = ssub.s32 2048, 2048
          %585 = vsyncadd %s571, %s584
          %s586 = smul.addr %s25, 16
          %s587 = sadd.s32 %s26, %s586
          %s588 = smul.addr %s587, 128
          %s589 = scalar_lea.hbm %s2, %s588
          %s590 = sshll.u32 %s574, 4
          %s591 = int_to_ptr.vmem [resolvable:$true] %s590
          %596 = dma.vmem_to_hbm [thread:$0]  %s591, 2048, %s589, %s571, 128, 128, 8
        $region32: #{tpu_custom_call.1} parent=27 // pred_fallthru
          _
        // Predicated region
        $region33: #{tpu_custom_call.1} parent=27 // pred_check
          %p597 = pneg %p130
        $region34: #{tpu_custom_call.1} parent=27 // pred_check_branch
          %599 = sbr.rel (%p597) target = $region36
        $region35: #{tpu_custom_call.1} parent=27 // pred_region
          %s601 = ssub.s32 2048, 2048
          %602 = vsyncadd %s576, %s601
          %s603 = smul.addr %s25, 16
          %s604 = sadd.s32 %s26, %s603
          %s605 = smul.addr %s604, 128
          %s606 = scalar_lea.hbm %s3, %s605
          %s607 = sshll.u32 %s579, 4
          %s608 = int_to_ptr.vmem [resolvable:$true] %s607
          %613 = dma.vmem_to_hbm [thread:$0]  %s608, 2048, %s606, %s576, 128, 128, 8
        $region36: #{tpu_custom_call.1} parent=27 // pred_fallthru
          _
      $region28: #{tpu_custom_call.1} parent=5 // pred_fallthru
        _
      %p614 = scmp.le.s32.totalorder 2, %s16
      // Predicated region
      $region37: #{tpu_custom_call.1} parent=5 // pred_check
        %p615 = pneg %p614
      $region38: #{tpu_custom_call.1} parent=5 // pred_check_branch
        %617 = sbr.rel (%p615) target = $region40
      $region39: #{tpu_custom_call.1} parent=5 // pred_region
        %s618 = ssub.s32 %s16, 2
        // Predicated region
        $region41: #{tpu_custom_call.1} parent=39 // pred_check
          %p619 = pneg %p108
        $region42: #{tpu_custom_call.1} parent=39 // pred_check_branch
          %621 = sbr.rel (%p619) target = $region44
        $region43: #{tpu_custom_call.1} parent=39 // pred_region
          %s622 = sand.u32 %s93, 1
          %s623 = scalar_lea.sflag [#allocation3], %s622
          %s624 = sand.u32 %s93, 1
          %s625 = smul.addr %s624, 128
          %s626 = scalar_lea.vmem [#allocation2], %s625
          %627 = dma.done %s623, 2048
        $region44: #{tpu_custom_call.1} parent=39 // pred_fallthru
          _
        // Predicated region
        $region45: #{tpu_custom_call.1} parent=39 // pred_check
          %p628 = pneg %p136
        $region46: #{tpu_custom_call.1} parent=39 // pred_check_branch
          %630 = sbr.rel (%p628) target = $region48
        $region47: #{tpu_custom_call.1} parent=39 // pred_region
          %s631 = sand.u32 %s121, 1
          %s632 = scalar_lea.sflag [#allocation5], %s631
          %s633 = sand.u32 %s121, 1
          %s634 = smul.addr %s633, 128
          %s635 = scalar_lea.vmem [#allocation4], %s634
          %636 = dma.done %s632, 2048
        $region48: #{tpu_custom_call.1} parent=39 // pred_fallthru
          _
      $region40: #{tpu_custom_call.1} parent=5 // pred_fallthru
        _
    $region6: #{tpu_custom_call.1} parent=1 // loop_footer
      %s20 = sadd.s32 1, %s16
    $region7: #{tpu_custom_call.1} parent=1 // loop_footer_branch
      %15 = sbr.rel target = $region3
    $region8: #{tpu_custom_call.1} parent=1 // loop_exit
      _
    %637 = vsyncpa [#allocation3], 1
    %s638 = scalar_lea.sflag [#allocation3], 1
    %639 = vsyncpa %s638, 1
    %640 = vsyncpa [#allocation5], 1
    %s641 = scalar_lea.sflag [#allocation5], 1
    %642 = vsyncpa %s641, 1

</llo_original>
